<compile_context>
chip_gen: v6e
topology: v6e:2x2x1
jax: 0.10.0
libtpu: 0.0.40
codegen_flags: <defaults>
</compile_context>

<pallas_src>
import functools

import jax
import jax.numpy as jnp
from jax.experimental import pallas as pl
from jax.experimental.pallas import tpu as pltpu

LANE = 128


def _round_up(v, m):
    return (v + m - 1) // m * m


def gcn_kernel(x_ref, adjc_ref, w_ref, bsum_ref, y_ref, stats_ref, *, K, N, Bb, Cp):
    """One batch block: y = x@W_0 + sum_{k>=1} adj_k @ (x@W_k) + sum_k b_k.

    Also emits per-block per-channel sum / sum-of-squares for BatchNorm stats.
    """
    x = x_ref[...]                                               # (Bb*N, Cin)

    # One wide MXU call for all K channel transforms (lanes = K*Cp).
    t = jnp.dot(x, w_ref[...], preferred_element_type=jnp.float32)  # (Bb*N, K*Cp)

    acc = t[:, :Cp]                                              # k=0: adj is identity
    if K > 1:
        adjc = adjc_ref[...]                                     # (N, (K-1)*N)
        parts = []
        for b in range(Bb):                                      # static, small
            # Stack the k>=1 transform outputs along rows: ((K-1)*N, Cp), so the
            # K-1 adjacency matmuls collapse into a single wider MXU call.
            t_stack = jnp.concatenate(
                [t[b * N:(b + 1) * N, k * Cp:(k + 1) * Cp] for k in range(1, K)],
                axis=0)
            parts.append(
                jnp.dot(adjc, t_stack.astype(adjc.dtype),
                        preferred_element_type=jnp.float32))     # (N, Cp)
        acc = acc + jnp.concatenate(parts, axis=0)

    y = acc + bsum_ref[...]                                      # single hoisted bias add
    y_ref[...] = y                                               # lane-dense store (Cp=128)

    # Partial BatchNorm statistics for this block (reduced across blocks in XLA).
    s = jnp.sum(y, axis=0, keepdims=True)                        # (1, Cp)
    sq = jnp.sum(y * y, axis=0, keepdims=True)                   # (1, Cp)
    stats_ref[...] = jnp.concatenate(
        [s, sq, jnp.zeros((6, Cp), jnp.float32)], axis=0)        # (8, Cp) block


def bn_relu_kernel(y_ref, scale_ref, shift_ref, o_ref):
    """Elementwise BatchNorm apply (precomputed scale/shift) + ReLU."""
    o_ref[...] = jnp.maximum(y_ref[...] * scale_ref[...] + shift_ref[...], 0.0)


def dcdgcn_forward(x_nchw, A, W, b, gamma, beta, *, K, compute_dtype=jnp.float32):
    """DCDGCN forward.  compute_dtype=jnp.bfloat16 casts matmul operands for
    higher MXU throughput on v6e/v7x (accumulation stays f32)."""
    B, Cin, N, _ = x_nchw.shape
    Cout = W.shape[-1]
    Cp = _round_up(Cout, LANE)                   # lane-dense channel padding

    # ---- batch blocking: prefer 2 big parallel grid steps (v7x dual TC) ------
    if B >= 2 and B % 2 == 0 and ((B // 2) * N) % 8 == 0:
        Bb = B // 2
    elif N % 8 == 0:
        Bb = 1
    else:
        Bb = B                                   # single full-array block
    G = B // Bb                                  # grid extent

    # ---- glue: NCHW (B, Cin, N, 1) -> (B*N, Cin) -----------------------------
    x = jnp.transpose(x_nchw[..., 0], (0, 2, 1)).reshape(B * N, Cin)
    x = x.astype(compute_dtype)

    # ---- glue: normalize_A (relu + symmetric degree normalization) ----------
    A_pos = jax.nn.relu(A.astype(jnp.float32))
    d = jnp.sum(A_pos, axis=1)
    dinv = 1.0 / jnp.sqrt(d + 1e-10)
    L = dinv[:, None] * A_pos * dinv[None, :]

    # ---- glue: Chebyshev-style supports for k>=1 (adj[k] = adj[k-1] @ L) -----
    # The k=0 identity support is never materialized (handled in-kernel).
    supports = []
    P = L
    for _ in range(1, K):
        supports.append(P)
        P = P @ L
    if supports:
        adj_cat = jnp.concatenate(supports, axis=1)       # (N, (K-1)*N)
    else:
        adj_cat = jnp.zeros((N, N), jnp.float32)          # unused when K == 1
    adj_cat = adj_cat.astype(compute_dtype)

    # ---- glue: weights -> lane-padded, branch-concatenated -------------------
    W_pad = jnp.pad(W.astype(jnp.float32), ((0, 0), (0, 0), (0, Cp - Cout)))
    W_cat = jnp.transpose(W_pad, (1, 0, 2)).reshape(Cin, K * Cp).astype(compute_dtype)
    b_sum = jnp.pad(jnp.sum(b.astype(jnp.float32), axis=0).reshape(1, Cout),
                    ((0, 0), (0, Cp - Cout)))             # (1, Cp)

    # ---- Pallas kernel 1: fused graph convolutions + partial BN stats --------
    y, stats = pl.pallas_call(
        functools.partial(gcn_kernel, K=K, N=N, Bb=Bb, Cp=Cp),
        out_shape=(
            jax.ShapeDtypeStruct((B * N, Cp), jnp.float32),
            jax.ShapeDtypeStruct((G * 8, Cp), jnp.float32),
        ),
        grid=(G,),
        in_specs=[
            pl.BlockSpec((Bb * N, Cin), lambda i: (i, 0)),
            pl.BlockSpec(adj_cat.shape, lambda i: (0, 0)),
            pl.BlockSpec((Cin, K * Cp), lambda i: (0, 0)),
            pl.BlockSpec((1, Cp), lambda i: (0, 0)),
        ],
        out_specs=[
            pl.BlockSpec((Bb * N, Cp), lambda i: (i, 0)),
            pl.BlockSpec((8, Cp), lambda i: (i, 0)),
        ],
        compiler_params=pltpu.CompilerParams(dimension_semantics=("parallel",)),
    )(x, adj_cat, W_cat, b_sum)

    # ---- glue: reduce partial stats -> BN scale/shift (training-mode stats) --
    stats = stats.reshape(G, 8, Cp)
    count = jnp.float32(B * N)
    total = jnp.sum(stats[:, 0, :], axis=0)               # (Cp,)
    totsq = jnp.sum(stats[:, 1, :], axis=0)
    mean = total / count
    var = jnp.maximum(totsq / count - mean * mean, 0.0)   # biased var (BN train mode)
    inv = jax.lax.rsqrt(var + 1e-5)
    gamma_p = jnp.pad(gamma.reshape(1, Cout).astype(jnp.float32),
                      ((0, 0), (0, Cp - Cout)))
    beta_p = jnp.pad(beta.reshape(1, Cout).astype(jnp.float32),
                     ((0, 0), (0, Cp - Cout)))
    scale = gamma_p * inv[None, :]                        # (1, Cp)
    shift = beta_p - mean[None, :] * scale                # (1, Cp)

    # ---- Pallas kernel 2: elementwise BN apply + ReLU -------------------------
    out = pl.pallas_call(
        bn_relu_kernel,
        out_shape=jax.ShapeDtypeStruct((B * N, Cp), jnp.float32),
        grid=(G,),
        in_specs=[
            pl.BlockSpec((Bb * N, Cp), lambda i: (i, 0)),
            pl.BlockSpec((1, Cp), lambda i: (0, 0)),
            pl.BlockSpec((1, Cp), lambda i: (0, 0)),
        ],
        out_specs=pl.BlockSpec((Bb * N, Cp), lambda i: (i, 0)),
        compiler_params=pltpu.CompilerParams(dimension_semantics=("parallel",)),
    )(y, scale, shift)

    # ---- glue: strip channel padding, back to NCHW (B, Cout, N, 1) ------------
    out = out.reshape(B, N, Cp)[:, :, :Cout]
    return jnp.transpose(out, (0, 2, 1))[..., None]


if __name__ == "__main__":
    key = jax.random.PRNGKey(0)
    B, Cin, N, Cout, K = 2, 8, 16, 32, 3

    k_x, k_a, k_w = jax.random.split(key, 3)
    # module input (NCHW): (batch, xdim, num_nodes, 1)
    x = jax.random.normal(k_x, (B, Cin, N, 1), dtype=jnp.float32)

    # Parameters, deterministic init (matching the __init__ shapes):
    #   A: (num_nodes, num_nodes), xavier_normal_ -> std = sqrt(2/(N+N))
    A = jax.random.normal(k_a, (N, N), dtype=jnp.float32) * jnp.sqrt(1.0 / N)
    #   K GraphConvolution weights: (xdim, num_out), xavier-style init
    W = jax.random.normal(k_w, (K, Cin, Cout), dtype=jnp.float32) * jnp.sqrt(
        2.0 / (Cin + Cout)
    )
    b = jnp.zeros((K, 1, Cout), dtype=jnp.float32)      # per-branch bias
    gamma = jnp.ones((1, Cout), dtype=jnp.float32)      # BatchNorm2d weight
    beta = jnp.zeros((1, Cout), dtype=jnp.float32)      # BatchNorm2d bias

    y = dcdgcn_forward(x, A, W, b, gamma, beta, K=K)
    jax.block_until_ready(y)
    assert y.shape == (B, Cout, N, 1), y.shape
    assert bool(jnp.all(y >= 0.0))  # ReLU output
    print("KERNEL_OK")
</pallas_src>

<mosaic_0001>
module attributes {stable_mosaic.version = 11 : i64} {
  func.func @gcn_kernel(%arg0: i32, %arg1: memref<16x8xf32, #tpu.memory_space<vmem>>, %arg2: memref<16x32xf32, #tpu.memory_space<vmem>>, %arg3: memref<8x384xf32, #tpu.memory_space<vmem>>, %arg4: memref<1x128xf32, #tpu.memory_space<vmem>>, %arg5: memref<16x128xf32, #tpu.memory_space<vmem>>, %arg6: memref<8x128xf32, #tpu.memory_space<vmem>>) attributes {dimension_semantics = [#tpu.dimension_semantics<parallel>], iteration_bounds = array<i64: 2>, scalar_prefetch = 0 : i64, scratch_operands = 0 : i64, tpu.core_type = #tpu.core_type<tc>, window_params = [{transform_indices = @transform_0, window_bounds = array<i64: 16, 8>}, {pipeline_mode = #tpu.pipeline_mode<synchronous>, transform_indices = @transform_1, window_bounds = array<i64: 16, 32>}, {pipeline_mode = #tpu.pipeline_mode<synchronous>, transform_indices = @transform_2, window_bounds = array<i64: 8, 384>}, {pipeline_mode = #tpu.pipeline_mode<synchronous>, transform_indices = @transform_3, window_bounds = array<i64: 1, 128>}, {transform_indices = @transform_4, window_bounds = array<i64: 16, 128>}, {transform_indices = @transform_5, window_bounds = array<i64: 8, 128>}]} {
    %c0 = arith.constant 0 : index
    %c0_0 = arith.constant 0 : index
    %0 = vector.load %arg1[%c0, %c0_0] : memref<16x8xf32, #tpu.memory_space<vmem>>, vector<16x8xf32>
    %c0_1 = arith.constant 0 : index
    %c0_2 = arith.constant 0 : index
    %1 = vector.load %arg3[%c0_1, %c0_2] : memref<8x384xf32, #tpu.memory_space<vmem>>, vector<8x384xf32>
    %cst = arith.constant dense<0.000000e+00> : vector<16x384xf32>
    %2 = tpu.matmul %0, %1, %cst {dimension_numbers = #tpu.dot_dimension_numbers<[1], [0], [0], [1], [0, 0, 1, 1], [], []>} : vector<16x8xf32>, vector<8x384xf32>, vector<16x384xf32> -> vector<16x384xf32>
    %3 = vector.extract_strided_slice %2 {offsets = [0, 0], sizes = [16, 128], strides = [1, 1]} : vector<16x384xf32> to vector<16x128xf32>
    %c0_3 = arith.constant 0 : index
    %c0_4 = arith.constant 0 : index
    %4 = vector.load %arg2[%c0_3, %c0_4] : memref<16x32xf32, #tpu.memory_space<vmem>>, vector<16x32xf32>
    %5 = vector.extract_strided_slice %2 {offsets = [0, 128], sizes = [16, 128], strides = [1, 1]} : vector<16x384xf32> to vector<16x128xf32>
    %6 = vector.extract_strided_slice %2 {offsets = [0, 256], sizes = [16, 128], strides = [1, 1]} : vector<16x384xf32> to vector<16x128xf32>
    %7 = tpu.concatenate %5, %6 in 0 : vector<16x128xf32>, vector<16x128xf32> -> vector<32x128xf32>
    %cst_5 = arith.constant dense<0.000000e+00> : vector<16x128xf32>
    %8 = tpu.matmul %4, %7, %cst_5 {dimension_numbers = #tpu.dot_dimension_numbers<[1], [0], [0], [1], [0, 0, 1, 1], [], []>} : vector<16x32xf32>, vector<32x128xf32>, vector<16x128xf32> -> vector<16x128xf32>
    %9 = arith.addf %3, %8 : vector<16x128xf32>
    %c0_6 = arith.constant 0 : index
    %c0_7 = arith.constant 0 : index
    %10 = vector.load %arg4[%c0_6, %c0_7] : memref<1x128xf32, #tpu.memory_space<vmem>>, vector<1x128xf32>
    %11 = vector.broadcast %10 : vector<1x128xf32> to vector<16x128xf32>
    %12 = arith.addf %9, %11 : vector<16x128xf32>
    %c0_8 = arith.constant 0 : index
    %c0_9 = arith.constant 0 : index
    %13 = vector.load %arg5[%c0_8, %c0_9] : memref<16x128xf32, #tpu.memory_space<vmem>>, vector<16x128xf32>
    tpu.vector_store %arg5[%c0_8, %c0_9], %12 {strides = array<i32>} : memref<16x128xf32, #tpu.memory_space<vmem>>, vector<16x128xf32>,
    %cst_10 = arith.constant dense<0.000000e+00> : vector<128xf32>
    %14 = vector.multi_reduction <add>, %12, %cst_10 [0] : vector<16x128xf32> to vector<128xf32>
    %15 = vector.shape_cast %14 : vector<128xf32> to vector<1x128xf32>
    %16 = arith.mulf %12, %12 : vector<16x128xf32>
    %cst_11 = arith.constant dense<0.000000e+00> : vector<128xf32>
    %17 = vector.multi_reduction <add>, %16, %cst_11 [0] : vector<16x128xf32> to vector<128xf32>
    %18 = vector.shape_cast %17 : vector<128xf32> to vector<1x128xf32>
    %cst_12 = arith.constant 0.000000e+00 : f32
    %19 = vector.broadcast %cst_12 : f32 to vector<6x128xf32>
    %20 = tpu.concatenate %15, %18, %19 in 0 : vector<1x128xf32>, vector<1x128xf32>, vector<6x128xf32> -> vector<8x128xf32>
    %c0_13 = arith.constant 0 : index
    %c0_14 = arith.constant 0 : index
    %21 = vector.load %arg6[%c0_13, %c0_14] : memref<8x128xf32, #tpu.memory_space<vmem>>, vector<8x128xf32>
    tpu.vector_store %arg6[%c0_13, %c0_14], %20 {strides = array<i32>} : memref<8x128xf32, #tpu.memory_space<vmem>>, vector<8x128xf32>,
    return
  }
  func.func @transform_0(%arg0: i32) -> (i32, i32) {
    %c0_i32 = arith.constant 0 : i32
    %c0_i32_0 = arith.constant 0 : i32
    return %arg0, %c0_i32 : i32, i32
  }
  func.func @transform_1(%arg0: i32) -> (i32, i32) {
    %c0_i32 = arith.constant 0 : i32
    %c0_i32_0 = arith.constant 0 : i32
    %c0_i32_1 = arith.constant 0 : i32
    return %c0_i32, %c0_i32_0 : i32, i32
  }
  func.func @transform_2(%arg0: i32) -> (i32, i32) {
    %c0_i32 = arith.constant 0 : i32
    %c0_i32_0 = arith.constant 0 : i32
    %c0_i32_1 = arith.constant 0 : i32
    return %c0_i32, %c0_i32_0 : i32, i32
  }
  func.func @transform_3(%arg0: i32) -> (i32, i32) {
    %c0_i32 = arith.constant 0 : i32
    %c0_i32_0 = arith.constant 0 : i32
    %c0_i32_1 = arith.constant 0 : i32
    return %c0_i32, %c0_i32_0 : i32, i32
  }
  func.func @transform_4(%arg0: i32) -> (i32, i32) {
    %c0_i32 = arith.constant 0 : i32
    %c0_i32_0 = arith.constant 0 : i32
    return %arg0, %c0_i32 : i32, i32
  }
  func.func @transform_5(%arg0: i32) -> (i32, i32) {
    %c0_i32 = arith.constant 0 : i32
    %c0_i32_0 = arith.constant 0 : i32
    return %arg0, %c0_i32 : i32, i32
  }
}

</mosaic_0001>

<llo_original>
// kernel: tpu_custom_call.1
$region0: #{tpu_custom_call.1}
  #allocation0 [shape = 'u32[]', space=smem, size = 0x4, offset = 0x4, fixed_abs, tag = 'smem constant byte address 0x4 - core index']
  #allocation1 [shape = 'u32[144,128]{1,0:T(1,128)}', space=vmem, size = 0x12000, scoped, tag = 'internal scratch']
  %s0 = inlined_call_operand.vmem [shape: f32[32,8], index: 0, kind: input, shape index: {}]
  %s1 = inlined_call_operand.vmem [shape: f32[16,32], index: 1, kind: input, shape index: {}]
  %s2 = inlined_call_operand.vmem [shape: f32[8,384], index: 2, kind: input, shape index: {}]
  %s3 = inlined_call_operand.vmem [shape: f32[1,128], index: 3, kind: input, shape index: {}]
  %s4 = inlined_call_operand.hbm [shape: f32[32,128], index: 4, kind: output, shape index: {0}]
  %s5 = inlined_call_operand.hbm [shape: f32[16,128], index: 5, kind: output, shape index: {1}]
  %6 = xla_tuple %s4, %s5
  %s7 = sld [smem:[#allocation0]]
  $region57: #{tpu_custom_call.1} parent=0
    _
  %s9 = ssub.s32 1, %s7
  %s10 = scalar_select 0, %s9, %s7
  $region1: #{tpu_custom_call.1} parent=0
    #allocation2 [shape = 'u8[16384]{0}', space=vmem, size = 0x4000, scoped, tag = 'output window, operand 0']
    #allocation3 [shape = 's32[2]{0}', space=sflag, size = 0x8, scoped, tag = 'scoped memory for tpu_custom_call.1']
    #allocation4 [shape = 'u8[8192]{0}', space=vmem, size = 0x2000, scoped, tag = 'output window, operand 1']
    #allocation5 [shape = 's32[2]{0}', space=sflag, size = 0x8, scoped, tag = 'scoped memory for tpu_custom_call.1']
    %11 = vsyncpa [#allocation3], 0
    %s12 = scalar_lea.sflag [#allocation3], 1
    %13 = vsyncpa %s12, 0
    %14 = vsyncpa [#allocation5], 0
    %s15 = scalar_lea.sflag [#allocation5], 1
    %16 = vsyncpa %s15, 0
    loop: start=0, step=1, limit=4
    $region2: #{tpu_custom_call.1} parent=1 // loop_pre_header
      _
    $region3: #{tpu_custom_call.1} parent=1 // loop_header
      %s18 = sphi 0, %s22
      %p19 = scmp.ge.s32.totalorder %s18, 4
      %s28 = sphi 0, %s30
      %s31 = sphi 0, %s28
      %s32 = sphi 0, %s31
      %s48 = sphi 0, %s32
      %s52 = sphi 0, %s52
      %s54 = sphi 0, %s52
      %s55 = sphi 0, %s54
      %s69 = sphi 0, %s55
      %s73 = sphi 0, %s73
      %s75 = sphi 0, %s73
      %s76 = sphi 0, %s75
      %s90 = sphi 0, %s76
      %s94 = sphi 0, %s94
      %s96 = sphi 0, %s94
      %s97 = sphi 0, %s96
      %s111 = sphi 0, %s97
      %s117 = sphi 0, %s119
      %s120 = sphi 0, %s117
      %s121 = sphi 0, %s120
      %s137 = sphi 0, %s121
      %s143 = sphi 0, %s145
      %s146 = sphi 0, %s143
      %s147 = sphi 0, %s146
      %s163 = sphi 0, %s147
    $region4: #{tpu_custom_call.1} parent=1 // loop_header_branch
      %21 = sbr.rel (%p19) target = $region8
    $region5: #{tpu_custom_call.1} parent=1 // loop_body
      %s23 = ssub.s32 %s18, 1
      %s24 = ssub.s32 %s18, 2
      %s25 = sadd.s32 %s18, 1
      %s26 = ssub.s32 %s18, %s25
      %p27 = scmp.eq.s32.totalorder %s26, 0
      %s29 = sadd.s32 %s28, 1
      %s30 = scalar_select %p27, %s28, %s29
      %p33 = pneg %p27
      %p34 = scmp.eq.s32.totalorder %s18, 1
      %p35 = por %p33, %p34
      %p36 = scmp.ne.s32.totalorder %s28, %s31
      %p37 = scmp.eq.s32.totalorder %s18, 0
      %p38 = por %p36, %p37
      %p39 = scmp.ne.s32.totalorder %s28, %s31
      %p40 = scmp.eq.s32.totalorder %s23, 1
      %p41 = por %p39, %p40
      %p42 = scmp.ne.s32.totalorder %s31, %s32
      %p43 = scmp.eq.s32.totalorder %s23, 0
      %p44 = por %p42, %p43
      %p45 = scmp.ne.s32.totalorder %s31, %s32
      %p46 = scmp.eq.s32.totalorder %s24, 1
      %p47 = por %p45, %p46
      %p49 = scmp.ne.s32.totalorder %s32, %s48
      %p50 = scmp.eq.s32.totalorder %s24, 0
      %p51 = por %p49, %p50
      %s53 = sadd.s32 %s52, 1
      %p56 = scmp.eq.s32.totalorder %s18, 1
      %p57 = scmp.ne.s32.totalorder %s52, %s54
      %p58 = scmp.eq.s32.totalorder %s18, 0
      %p59 = por %p57, %p58
      %p60 = scmp.ne.s32.totalorder %s52, %s54
      %p61 = scmp.eq.s32.totalorder %s23, 1
      %p62 = por %p60, %p61
      %p63 = scmp.ne.s32.totalorder %s54, %s55
      %p64 = scmp.eq.s32.totalorder %s23, 0
      %p65 = por %p63, %p64
      %p66 = scmp.ne.s32.totalorder %s54, %s55
      %p67 = scmp.eq.s32.totalorder %s24, 1
      %p68 = por %p66, %p67
      %p70 = scmp.ne.s32.totalorder %s55, %s69
      %p71 = scmp.eq.s32.totalorder %s24, 0
      %p72 = por %p70, %p71
      %s74 = sadd.s32 %s73, 1
      %p77 = scmp.eq.s32.totalorder %s18, 1
      %p78 = scmp.ne.s32.totalorder %s73, %s75
      %p79 = scmp.eq.s32.totalorder %s18, 0
      %p80 = por %p78, %p79
      %p81 = scmp.ne.s32.totalorder %s73, %s75
      %p82 = scmp.eq.s32.totalorder %s23, 1
      %p83 = por %p81, %p82
      %p84 = scmp.ne.s32.totalorder %s75, %s76
      %p85 = scmp.eq.s32.totalorder %s23, 0
      %p86 = por %p84, %p85
      %p87 = scmp.ne.s32.totalorder %s75, %s76
      %p88 = scmp.eq.s32.totalorder %s24, 1
      %p89 = por %p87, %p88
      %p91 = scmp.ne.s32.totalorder %s76, %s90
      %p92 = scmp.eq.s32.totalorder %s24, 0
      %p93 = por %p91, %p92
      %s95 = sadd.s32 %s94, 1
      %p98 = scmp.eq.s32.totalorder %s18, 1
      %p99 = scmp.ne.s32.totalorder %s94, %s96
      %p100 = scmp.eq.s32.totalorder %s18, 0
      %p101 = por %p99, %p100
      %p102 = scmp.ne.s32.totalorder %s94, %s96
      %p103 = scmp.eq.s32.totalorder %s23, 1
      %p104 = por %p102, %p103
      %p105 = scmp.ne.s32.totalorder %s96, %s97
      %p106 = scmp.eq.s32.totalorder %s23, 0
      %p107 = por %p105, %p106
      %p108 = scmp.ne.s32.totalorder %s96, %s97
      %p109 = scmp.eq.s32.totalorder %s24, 1
      %p110 = por %p108, %p109
      %p112 = scmp.ne.s32.totalorder %s97, %s111
      %p113 = scmp.eq.s32.totalorder %s24, 0
      %p114 = por %p112, %p113
      %s115 = ssub.s32 %s18, %s25
      %p116 = scmp.eq.s32.totalorder %s115, 0
      %s118 = sadd.s32 %s117, 1
      %s119 = scalar_select %p116, %s117, %s118
      %p122 = pneg %p116
      %p123 = scmp.eq.s32.totalorder %s18, 1
      %p124 = por %p122, %p123
      %p125 = scmp.ne.s32.totalorder %s117, %s120
      %p126 = scmp.eq.s32.totalorder %s18, 0
      %p127 = por %p125, %p126
      %p128 = scmp.ne.s32.totalorder %s117, %s120
      %p129 = scmp.eq.s32.totalorder %s23, 1
      %p130 = por %p128, %p129
      %p131 = scmp.ne.s32.totalorder %s120, %s121
      %p132 = scmp.eq.s32.totalorder %s23, 0
      %p133 = por %p131, %p132
      %p134 = scmp.ne.s32.totalorder %s120, %s121
      %p135 = scmp.eq.s32.totalorder %s24, 1
      %p136 = por %p134, %p135
      %p138 = scmp.ne.s32.totalorder %s121, %s137
      %p139 = scmp.eq.s32.totalorder %s24, 0
      %p140 = por %p138, %p139
      %s141 = ssub.s32 %s18, %s25
      %p142 = scmp.eq.s32.totalorder %s141, 0
      %s144 = sadd.s32 %s143, 1
      %s145 = scalar_select %p142, %s143, %s144
      %p148 = pneg %p142
      %p149 = scmp.eq.s32.totalorder %s18, 1
      %p150 = por %p148, %p149
      %p151 = scmp.ne.s32.totalorder %s143, %s146
      %p152 = scmp.eq.s32.totalorder %s18, 0
      %p153 = por %p151, %p152
      %p154 = scmp.ne.s32.totalorder %s143, %s146
      %p155 = scmp.eq.s32.totalorder %s23, 1
      %p156 = por %p154, %p155
      %p157 = scmp.ne.s32.totalorder %s146, %s147
      %p158 = scmp.eq.s32.totalorder %s23, 0
      %p159 = por %p157, %p158
      %p160 = scmp.ne.s32.totalorder %s146, %s147
      %p161 = scmp.eq.s32.totalorder %s24, 1
      %p162 = por %p160, %p161
      %p164 = scmp.ne.s32.totalorder %s147, %s163
      %p165 = scmp.eq.s32.totalorder %s24, 0
      %p166 = por %p164, %p165
      %p167 = scmp.le.s32.totalorder 1, %s18
      %p168 = scmp.lt.s32.totalorder %s18, 3
      %p169 = pnand %p167, %p168
      %p170 = pneg %p169
      // Predicated region
      $region9: #{tpu_custom_call.1} parent=5 // pred_check
        _
      $region10: #{tpu_custom_call.1} parent=5 // pred_check_branch
        %172 = sbr.rel (%p169) target = $region12
      $region11: #{tpu_custom_call.1} parent=5 // pred_region
        %s173 = ssub.s32 %s18, 1
        // Predicated region
        $region13: #{tpu_custom_call.1} parent=11 // pred_check
          %p174 = pneg %p65
        $region14: #{tpu_custom_call.1} parent=11 // pred_check_branch
          %176 = sbr.rel (%p174) target = $region16
        $region15: #{tpu_custom_call.1} parent=11 // pred_region
          _
        $region16: #{tpu_custom_call.1} parent=11 // pred_fallthru
          _
        // Predicated region
        $region17: #{tpu_custom_call.1} parent=11 // pred_check
          %p177 = pneg %p86
        $region18: #{tpu_custom_call.1} parent=11 // pred_check_branch
          %179 = sbr.rel (%p177) target = $region20
        $region19: #{tpu_custom_call.1} parent=11 // pred_region
          _
        $region20: #{tpu_custom_call.1} parent=11 // pred_fallthru
          _
        // Predicated region
        $region21: #{tpu_custom_call.1} parent=11 // pred_check
          %p180 = pneg %p107
        $region22: #{tpu_custom_call.1} parent=11 // pred_check_branch
          %182 = sbr.rel (%p180) target = $region24
        $region23: #{tpu_custom_call.1} parent=11 // pred_region
          _
        $region24: #{tpu_custom_call.1} parent=11 // pred_fallthru
          _
      $region12: #{tpu_custom_call.1} parent=5 // pred_fallthru
        _
      %p183 = scmp.lt.s32.totalorder %s18, 2
      // Predicated region
      $region25: #{tpu_custom_call.1} parent=5 // pred_check
        %p184 = pneg %p183
      $region26: #{tpu_custom_call.1} parent=5 // pred_check_branch
        %186 = sbr.rel (%p184) target = $region28
      $region27: #{tpu_custom_call.1} parent=5 // pred_region
        // Predicated region
        $region29: #{tpu_custom_call.1} parent=27 // pred_check
          %p187 = pneg %p38
        $region30: #{tpu_custom_call.1} parent=27 // pred_check_branch
          %189 = sbr.rel (%p187) target = $region32
        $region31: #{tpu_custom_call.1} parent=27 // pred_region
          %s190 = smul.u32 2, %s18
          %p191 = scmp.lt.s32.totalorder %s190, 3
          %s192 = scalar_select %p191, %s190, 3
          %s193 = smul.addr %s192, 8
          %s194 = scalar_lea.vmem %s0, %s193
          %s195 = smul.u32 2, %s18
        $region32: #{tpu_custom_call.1} parent=27 // pred_fallthru
          _
      $region28: #{tpu_custom_call.1} parent=5 // pred_fallthru
        _
      %p196 = scmp.le.s32.totalorder 1, %s18
      %p197 = scmp.lt.s32.totalorder %s18, 3
      %p198 = pnand %p196, %p197
      %p199 = pneg %p198
      // Predicated region
      $region33: #{tpu_custom_call.1} parent=5 // pred_check
        _
      $region34: #{tpu_custom_call.1} parent=5 // pred_check_branch
        %201 = sbr.rel (%p198) target = $region36
      $region35: #{tpu_custom_call.1} parent=5 // pred_region
        %s202 = ssub.s32 %s18, 1
        %s203 = smul.u32 2, %s23
        %p204 = scmp.lt.s32.totalorder %s203, 3
        %s205 = scalar_select %p204, %s203, 3
        %s206 = smul.addr %s205, 8
        %s207 = scalar_lea.vmem %s0, %s206
        %p208 = pneg %p44
        %p209 = pneg %p41
        %p210 = pneg %p65
        %p211 = pneg %p62
        %p212 = pneg %p86
        %p213 = pneg %p83
        %p214 = pneg %p107
        %p215 = pneg %p104
        %p216 = pneg %p133
        %p217 = pneg %p130
        %s218 = sand.u32 %s120, 1
        %s219 = scalar_lea.sflag [#allocation3], %s218
        %s220 = sand.u32 %s120, 1
        %s221 = smul.addr %s220, 16
        %s222 = scalar_lea.vmem [#allocation2], %s221
        %p223 = pneg %p159
        %p224 = pneg %p156
        %s225 = sand.u32 %s146, 1
        %s226 = scalar_lea.sflag [#allocation5], %s225
        %s227 = sand.u32 %s146, 1
        %s228 = smul.addr %s227, 8
        %s229 = scalar_lea.vmem [#allocation4], %s228
        %s230 = smul.u32 2, %s23
        %p231 = scmp.lt.s32.totalorder %s230, 3
        %s232 = scalar_select %p231, %s230, 3
        %s233 = smul.addr %s232, 8
        %s234 = scalar_lea.vmem %s0, %s233
        %s235 = smul.u32 2, %s23
        %s236 = smul.u32 2, %s23
        %v237 = vld [vmem:[%s234] sm:$0xff]
        %v238 = vld [vmem:[%s234 + $0x8] sm:$0xff]
        %v239 = vld [vmem:[%s2] sm:$0xff]
        %v240 = vld [vmem:[%s2 + $0x8] sm:$0xff]
        %v241 = vld [vmem:[%s2 + $0x10] sm:$0xff]
        %vm242 = vcmask 64512
        %v244 = vsel %vm242, %v237, 0
        %v247 = vsel %vm242, %v238, 0
        %249 = vmatprep.subr.mxu0 0.0
        %250 = vmatpush1.msra.mxu0 0.0
        %251 = vmatprep.subr.mxu0 0.0
        %252 = vmatpush1.msra.mxu0 0.0
        %253 = vmatprep.subr.mxu0 0.0
        %254 = vmatpush1.msra.mxu0 0.0
        %255 = vmatprep.subr.mxu0 0.0
        %256 = vmatpush1.msra.mxu0 0.0
        %257 = vmatprep.subr.mxu0 0.0
        %258 = vmatpush1.msra.mxu0 0.0
        %259 = vmatprep.subr.mxu0 0.0
        %260 = vmatpush1.msra.mxu0 0.0
        %261 = vmatprep.subr.mxu0 0.0
        %262 = vmatpush1.msra.mxu0 0.0
        %263 = vmatprep.subr.mxu0 0.0
        %264 = vmatpush1.msra.mxu0 0.0
        %265 = vmatprep.subr.mxu0 0.0
        %266 = vmatpush1.msra.mxu0 0.0
        %267 = vmatprep.subr.mxu0 0.0
        %268 = vmatpush1.msra.mxu0 0.0
        %269 = vmatprep.subr.mxu0 0.0
        %270 = vmatpush1.msra.mxu0 0.0
        %271 = vmatprep.subr.mxu0 0.0
        %272 = vmatpush1.msra.mxu0 0.0
        %273 = vmatprep.subr.mxu0 0.0
        %274 = vmatpush1.msra.mxu0 0.0
        %275 = vmatprep.subr.mxu0 0.0
        %276 = vmatpush1.msra.mxu0 0.0
        %277 = vmatprep.subr.mxu0 0.0
        %278 = vmatpush1.msra.mxu0 0.0
        %279 = vmatprep.subr.mxu0 %v240
        %280 = vmatpush1.msra.mxu0 %v239
        %281 = vmatprep.subr.mxu0 0.0
        %282 = vmatpush2.msra.mxu0 0.0
        %283 = vmatprep.subr.mxu0 0.0
        %284 = vmatpush2.msra.mxu0 0.0
        %285 = vmatprep.subr.mxu0 0.0
        %286 = vmatpush2.msra.mxu0 0.0
        %287 = vmatprep.subr.mxu0 0.0
        %288 = vmatpush2.msra.mxu0 0.0
        %289 = vmatprep.subr.mxu0 0.0
        %290 = vmatpush2.msra.mxu0 0.0
        %291 = vmatprep.subr.mxu0 0.0
        %292 = vmatpush2.msra.mxu0 0.0
        %293 = vmatprep.subr.mxu0 0.0
        %294 = vmatpush2.msra.mxu0 0.0
        %295 = vmatprep.subr.mxu0 0.0
        %296 = vmatpush2.msra.mxu0 0.0
        %297 = vmatprep.subr.mxu0 0.0
        %298 = vmatpush2.msra.mxu0 0.0
        %299 = vmatprep.subr.mxu0 0.0
        %300 = vmatpush2.msra.mxu0 0.0
        %301 = vmatprep.subr.mxu0 0.0
        %302 = vmatpush2.msra.mxu0 0.0
        %303 = vmatprep.subr.mxu0 0.0
        %304 = vmatpush2.msra.mxu0 0.0
        %305 = vmatprep.subr.mxu0 0.0
        %306 = vmatpush2.msra.mxu0 0.0
        %307 = vmatprep.subr.mxu0 0.0
        %308 = vmatpush2.msra.mxu0 0.0
        %309 = vmatprep.subr.mxu0 0.0
        %310 = vmatpush2.msra.mxu0 0.0
        %311 = vmatprep.subr.mxu0 0.0
        %312 = vmatpush2.msra.mxu0 0.0
        %313 = vmatprep.mubr.f32.mxu0 0.0
        %314 = vmatmul.mubr.f32.gmra.mxu0 %v244
        %v315 = vpop.f32.mrf.mxu0
        %v316 = vadd.f32 0.0, %v315
        %v317 = vpop.f32.mrf.mxu0
        %v318 = vadd.f32 0.0, %v317
        %319 = vmatprep.mubr.f32.mxu0 0.0
        %320 = vmatmul.mubr.f32.gmra.mxu0 %v247
        %v321 = vpop.f32.mrf.mxu0
        %v322 = vadd.f32 0.0, %v321
        %v323 = vpop.f32.mrf.mxu0
        %v324 = vadd.f32 0.0, %v323
        %325 = vdwg.mxu0
        %326 = vmatprep.subr.mxu0 0.0
        %327 = vmatpush1.msra.mxu0 0.0
        %328 = vmatprep.subr.mxu0 0.0
        %329 = vmatpush1.msra.mxu0 0.0
        %330 = vmatprep.subr.mxu0 0.0
        %331 = vmatpush1.msra.mxu0 0.0
        %332 = vmatprep.subr.mxu0 0.0
        %333 = vmatpush1.msra.mxu0 0.0
        %334 = vmatprep.subr.mxu0 0.0
        %335 = vmatpush1.msra.mxu0 0.0
        %336 = vmatprep.subr.mxu0 0.0
        %337 = vmatpush1.msra.mxu0 0.0
        %338 = vmatprep.subr.mxu0 0.0
        %339 = vmatpush1.msra.mxu0 0.0
        %340 = vmatprep.subr.mxu0 0.0
        %341 = vmatpush1.msra.mxu0 0.0
        %342 = vmatprep.subr.mxu0 0.0
        %343 = vmatpush1.msra.mxu0 0.0
        %344 = vmatprep.subr.mxu0 0.0
        %345 = vmatpush1.msra.mxu0 0.0
        %346 = vmatprep.subr.mxu0 0.0
        %347 = vmatpush1.msra.mxu0 0.0
        %348 = vmatprep.subr.mxu0 0.0
        %349 = vmatpush1.msra.mxu0 0.0
        %350 = vmatprep.subr.mxu0 0.0
        %351 = vmatpush1.msra.mxu0 0.0
        %352 = vmatprep.subr.mxu0 0.0
        %353 = vmatpush1.msra.mxu0 0.0
        %354 = vmatprep.subr.mxu0 0.0
        %355 = vmatpush1.msra.mxu0 0.0
        %356 = vmatprep.subr.mxu0 0.0
        %357 = vmatpush1.msra.mxu0 %v241
        %358 = vmatprep.subr.mxu0 0.0
        %359 = vmatpush2.msra.mxu0 0.0
        %360 = vmatprep.subr.mxu0 0.0
        %361 = vmatpush2.msra.mxu0 0.0
        %362 = vmatprep.subr.mxu0 0.0
        %363 = vmatpush2.msra.mxu0 0.0
        %364 = vmatprep.subr.mxu0 0.0
        %365 = vmatpush2.msra.mxu0 0.0
        %366 = vmatprep.subr.mxu0 0.0
        %367 = vmatpush2.msra.mxu0 0.0
        %368 = vmatprep.subr.mxu0 0.0
        %369 = vmatpush2.msra.mxu0 0.0
        %370 = vmatprep.subr.mxu0 0.0
        %371 = vmatpush2.msra.mxu0 0.0
        %372 = vmatprep.subr.mxu0 0.0
        %373 = vmatpush2.msra.mxu0 0.0
        %374 = vmatprep.subr.mxu0 0.0
        %375 = vmatpush2.msra.mxu0 0.0
        %376 = vmatprep.subr.mxu0 0.0
        %377 = vmatpush2.msra.mxu0 0.0
        %378 = vmatprep.subr.mxu0 0.0
        %379 = vmatpush2.msra.mxu0 0.0
        %380 = vmatprep.subr.mxu0 0.0
        %381 = vmatpush2.msra.mxu0 0.0
        %382 = vmatprep.subr.mxu0 0.0
        %383 = vmatpush2.msra.mxu0 0.0
        %384 = vmatprep.subr.mxu0 0.0
        %385 = vmatpush2.msra.mxu0 0.0
        %386 = vmatprep.subr.mxu0 0.0
        %387 = vmatpush2.msra.mxu0 0.0
        %388 = vmatprep.subr.mxu0 0.0
        %389 = vmatpush2.msra.mxu0 0.0
        %390 = vmatprep.mubr.f32.mxu0 0.0
        %391 = vmatmul.mubr.f32.gmra.mxu0 %v244
        %v392 = vpop.f32.mrf.mxu0
        %v393 = vadd.f32 0.0, %v392
        %v394 = vpop.f32.mrf.mxu0
        %395 = vmatprep.mubr.f32.mxu0 0.0
        %396 = vmatmul.mubr.f32.gmra.mxu0 %v247
        %v397 = vpop.f32.mrf.mxu0
        %v398 = vadd.f32 0.0, %v397
        %v399 = vpop.f32.mrf.mxu0
        %400 = vdwg.mxu0
        %v401 = vld [vmem:[%s1] sm:$0xff]
        %v402 = vld [vmem:[%s1 + $0x8] sm:$0xff]
        %vm403 = vcmask 261120
        %v405 = vsel %vm403, %v401, 0
        %v408 = vsel %vm403, %v402, 0
        %410 = vmatprep.subr.mxu0 0.0
        %411 = vmatpush1.msra.mxu0 0.0
        %412 = vmatprep.subr.mxu0 0.0
        %413 = vmatpush1.msra.mxu0 0.0
        %414 = vmatprep.subr.mxu0 0.0
        %415 = vmatpush1.msra.mxu0 0.0
        %416 = vmatprep.subr.mxu0 0.0
        %417 = vmatpush1.msra.mxu0 0.0
        %418 = vmatprep.subr.mxu0 0.0
        %419 = vmatpush1.msra.mxu0 0.0
        %420 = vmatprep.subr.mxu0 0.0
        %421 = vmatpush1.msra.mxu0 0.0
        %422 = vmatprep.subr.mxu0 0.0
        %423 = vmatpush1.msra.mxu0 0.0
        %424 = vmatprep.subr.mxu0 0.0
        %425 = vmatpush1.msra.mxu0 0.0
        %426 = vmatprep.subr.mxu0 0.0
        %427 = vmatpush1.msra.mxu0 0.0
        %428 = vmatprep.subr.mxu0 0.0
        %429 = vmatpush1.msra.mxu0 0.0
        %430 = vmatprep.subr.mxu0 0.0
        %431 = vmatpush1.msra.mxu0 0.0
        %432 = vmatprep.subr.mxu0 0.0
        %433 = vmatpush1.msra.mxu0 0.0
        %434 = vmatprep.subr.mxu0 0.0
        %435 = vmatpush1.msra.mxu0 %v398
        %436 = vmatprep.subr.mxu0 0.0
        %437 = vmatpush1.msra.mxu0 %v393
        %438 = vmatprep.subr.mxu0 0.0
        %439 = vmatpush1.msra.mxu0 %v324
        %440 = vmatprep.subr.mxu0 0.0
        %441 = vmatpush1.msra.mxu0 %v318
        %442 = vmatprep.subr.mxu0 0.0
        %443 = vmatpush2.msra.mxu0 0.0
        %444 = vmatprep.subr.mxu0 0.0
        %445 = vmatpush2.msra.mxu0 0.0
        %446 = vmatprep.subr.mxu0 0.0
        %447 = vmatpush2.msra.mxu0 0.0
        %448 = vmatprep.subr.mxu0 0.0
        %449 = vmatpush2.msra.mxu0 0.0
        %450 = vmatprep.subr.mxu0 0.0
        %451 = vmatpush2.msra.mxu0 0.0
        %452 = vmatprep.subr.mxu0 0.0
        %453 = vmatpush2.msra.mxu0 0.0
        %454 = vmatprep.subr.mxu0 0.0
        %455 = vmatpush2.msra.mxu0 0.0
        %456 = vmatprep.subr.mxu0 0.0
        %457 = vmatpush2.msra.mxu0 0.0
        %458 = vmatprep.subr.mxu0 0.0
        %459 = vmatpush2.msra.mxu0 0.0
        %460 = vmatprep.subr.mxu0 0.0
        %461 = vmatpush2.msra.mxu0 0.0
        %462 = vmatprep.subr.mxu0 0.0
        %463 = vmatpush2.msra.mxu0 0.0
        %464 = vmatprep.subr.mxu0 0.0
        %465 = vmatpush2.msra.mxu0 0.0
        %466 = vmatprep.subr.mxu0 0.0
        %467 = vmatpush2.msra.mxu0 0.0
        %468 = vmatprep.subr.mxu0 0.0
        %469 = vmatpush2.msra.mxu0 0.0
        %470 = vmatprep.subr.mxu0 0.0
        %471 = vmatpush2.msra.mxu0 0.0
        %472 = vmatprep.subr.mxu0 0.0
        %473 = vmatpush2.msra.mxu0 0.0
        %474 = vmatprep.mubr.f32.mxu0 0.0
        %475 = vmatmul.mubr.f32.gmra.mxu0 %v405
        %v476 = vpop.f32.mrf.mxu0
        %v477 = vadd.f32 0.0, %v476
        %v478 = vpop.f32.mrf.mxu0
        %479 = vmatprep.mubr.f32.mxu0 0.0
        %480 = vmatmul.mubr.f32.gmra.mxu0 %v408
        %v481 = vpop.f32.mrf.mxu0
        %v482 = vadd.f32 0.0, %v481
        %v483 = vpop.f32.mrf.mxu0
        %484 = vdwg.mxu0
        %v485 = vadd.f32 %v316, %v477
        %v486 = vadd.f32 %v322, %v482
        %v487 = vld [vmem:[%s3] sm:$0x1]
        %v489 = vlaneseq
        %v490 = vshrl.u32 %v489, 7
        %v491 = vsub.s32 0, %v490
        %v492 = vrot.slane %v487, %v491
        %v494 = vadd.f32 %v485, %v492
        %v495 = vadd.f32 %v486, %v492
        %496 = vst [vmem:[%s222] sm:$0xff] %v494
        %497 = vst [vmem:[%s222 + $0x8] sm:$0xff] %v495
        %v498 = vadd.f32 %v494, %v495
        %v499 = vrot.slane %v498, 4
        %v500 = vadd.f32 %v498, %v499
        %v501 = vrot.slane %v500, 2
        %v502 = vadd.f32 %v500, %v501
        %v503 = vrot.slane %v502, 1
        %v504 = vadd.f32 %v502, %v503
        %v505 = vmul.f32 %v494, %v494
        %v506 = vmul.f32 %v495, %v495
        %v507 = vadd.f32 %v505, %v506
        %v508 = vrot.slane %v507, 4
        %v509 = vadd.f32 %v507, %v508
        %v510 = vrot.slane %v509, 2
        %v511 = vadd.f32 %v509, %v510
        %v512 = vrot.slane %v511, 1
        %v513 = vadd.f32 %v511, %v512
        %vm514 = vcmask 1040384
        %v515 = vsel %vm514, %v504, %v513
        %vm516 = vcmask 1041408
        %v517 = vsel %vm516, %v515, 0.0
        %518 = vst [vmem:[%s229] sm:$0xff] %v517
        %s519 = sand.u32 %s120, 1
        %s520 = scalar_lea.sflag [#allocation3], %s519
        %s521 = sand.u32 %s120, 1
        %s522 = smul.addr %s521, 16
        %s523 = scalar_lea.vmem [#allocation2], %s522
        %s524 = sand.u32 %s146, 1
        %s525 = scalar_lea.sflag [#allocation5], %s524
        %s526 = sand.u32 %s146, 1
        %s527 = smul.addr %s526, 8
        %s528 = scalar_lea.vmem [#allocation4], %s527
        // Predicated region
        $region37: #{tpu_custom_call.1} parent=35 // pred_check
          %p529 = pneg %p130
        $region38: #{tpu_custom_call.1} parent=35 // pred_check_branch
          %531 = sbr.rel (%p529) target = $region40
        $region39: #{tpu_custom_call.1} parent=35 // pred_region
          %s532 = smul.u32 2, %s23
          %s534 = ssub.s32 256, 256
          %535 = vsyncadd %s520, %s534
          %s536 = smul.addr %s532, 128
          %s537 = scalar_lea.hbm %s4, %s536
          %s538 = sshll.u32 %s523, 4
          %s539 = int_to_ptr.vmem [resolvable:$true] %s538
          %544 = dma.vmem_to_hbm [thread:$0]  %s539, 256, %s537, %s520, 128, 128, 8
        $region40: #{tpu_custom_call.1} parent=35 // pred_fallthru
          _
        // Predicated region
        $region41: #{tpu_custom_call.1} parent=35 // pred_check
          %p545 = pneg %p156
        $region42: #{tpu_custom_call.1} parent=35 // pred_check_branch
          %547 = sbr.rel (%p545) target = $region44
        $region43: #{tpu_custom_call.1} parent=35 // pred_region
          %s549 = ssub.s32 128, 128
          %550 = vsyncadd %s525, %s549
          %s551 = smul.addr %s23, 128
          %s552 = scalar_lea.hbm %s5, %s551
          %s554 = sshll.u32 %s528, 4
          %s555 = int_to_ptr.vmem [resolvable:$true] %s554
          %557 = dma.vmem_to_hbm [thread:$0]  %s555, 128, %s552, %s525
        $region44: #{tpu_custom_call.1} parent=35 // pred_fallthru
          _
      $region36: #{tpu_custom_call.1} parent=5 // pred_fallthru
        _
      %p558 = scmp.le.s32.totalorder 2, %s18
      // Predicated region
      $region45: #{tpu_custom_call.1} parent=5 // pred_check
        %p559 = pneg %p558
      $region46: #{tpu_custom_call.1} parent=5 // pred_check_branch
        %561 = sbr.rel (%p559) target = $region48
      $region47: #{tpu_custom_call.1} parent=5 // pred_region
        %s562 = ssub.s32 %s18, 2
        // Predicated region
        $region49: #{tpu_custom_call.1} parent=47 // pred_check
          %p563 = pneg %p136
        $region50: #{tpu_custom_call.1} parent=47 // pred_check_branch
          %565 = sbr.rel (%p563) target = $region52
        $region51: #{tpu_custom_call.1} parent=47 // pred_region
          %s566 = sand.u32 %s121, 1
          %s567 = scalar_lea.sflag [#allocation3], %s566
          %s568 = sand.u32 %s121, 1
          %s569 = smul.addr %s568, 16
          %s570 = scalar_lea.vmem [#allocation2], %s569
          %571 = dma.done %s567, 256
        $region52: #{tpu_custom_call.1} parent=47 // pred_fallthru
          _
        // Predicated region
        $region53: #{tpu_custom_call.1} parent=47 // pred_check
          %p572 = pneg %p162
        $region54: #{tpu_custom_call.1} parent=47 // pred_check_branch
          %574 = sbr.rel (%p572) target = $region56
        $region55: #{tpu_custom_call.1} parent=47 // pred_region
          %s575 = sand.u32 %s147, 1
          %s576 = scalar_lea.sflag [#allocation5], %s575
          %s577 = sand.u32 %s147, 1
          %s578 = smul.addr %s577, 8
          %s579 = scalar_lea.vmem [#allocation4], %s578
          %580 = dma.done %s576, 128
        $region56: #{tpu_custom_call.1} parent=47 // pred_fallthru
          _
      $region48: #{tpu_custom_call.1} parent=5 // pred_fallthru
        _
    $region6: #{tpu_custom_call.1} parent=1 // loop_footer
      %s22 = sadd.s32 1, %s18
    $region7: #{tpu_custom_call.1} parent=1 // loop_footer_branch
      %17 = sbr.rel target = $region3
    $region8: #{tpu_custom_call.1} parent=1 // loop_exit
      _
    %581 = vsyncpa [#allocation3], 1
    %s582 = scalar_lea.sflag [#allocation3], 1
    %583 = vsyncpa %s582, 1
    %584 = vsyncpa [#allocation5], 1
    %s585 = scalar_lea.sflag [#allocation5], 1
    %586 = vsyncpa %s585, 1

</llo_original>
